<compile_context>
chip_gen: v7x
topology: tpu7x:2x2x1
jax: 0.10.0
libtpu: 0.0.40
codegen_flags: <defaults>
</compile_context>

<pallas_src>
import functools
import math

import jax
import jax.numpy as jnp
from jax import lax
from jax.experimental import pallas as pl
from jax.experimental.pallas import tpu as pltpu

FEAT_CHANNELS = (64, 64, 128, 256, 512)  # real channel counts of feat0..feat4


# ----------------------------------------------------------------------------
# Pallas kernel: fused matmul (+BN shift; scale pre-folded) (+residual) (+ReLU)
# ----------------------------------------------------------------------------

def _fused_matmul_kernel(*refs, apply_relu, has_res, multi_k):
    if multi_k:
        if has_res:
            x_ref, w_ref, shift_ref, res_ref, o_ref, acc_ref = refs
        else:
            x_ref, w_ref, shift_ref, o_ref, acc_ref = refs
            res_ref = None
    else:
        if has_res:
            x_ref, w_ref, shift_ref, res_ref, o_ref = refs
        else:
            x_ref, w_ref, shift_ref, o_ref = refs
            res_ref = None
        acc_ref = None

    def epilogue(acc):
        y = acc + shift_ref[...]
        if res_ref is not None:
            y = y + res_ref[...].astype(jnp.float32)
        if apply_relu:
            y = jnp.maximum(y, 0.0)
        o_ref[...] = y.astype(o_ref.dtype)

    if multi_k:
        kk = pl.program_id(2)

        @pl.when(kk == 0)
        def _init():
            acc_ref[...] = jnp.zeros_like(acc_ref)

        acc_ref[...] += jnp.dot(x_ref[...], w_ref[...],
                                preferred_element_type=jnp.float32)

        @pl.when(kk == pl.num_programs(2) - 1)
        def _finalize():
            epilogue(acc_ref[...])
    else:
        # Single K block: no accumulator scratch, no zero-init, no RMW.
        epilogue(jnp.dot(x_ref[...], w_ref[...],
                         preferred_element_type=jnp.float32))


def _round_up(x, m):
    return ((x + m - 1) // m) * m


def _tiles(m, n):
    """Row / lane tiles.  Lane tiles are multiples of 128 (unmasked stores);
    keep >=2 'parallel' programs when possible so a v7x second TC gets work."""
    mp = _round_up(max(m, 8), 8)
    tm = min(256, mp)
    if mp // tm >= 2:
        tn = min(n, 256)
    elif n > 128:
        tn = 128                       # split N for the second core
    else:
        tn = n
        if mp >= 16:                   # split rows instead
            tm = max(8, ((mp // 2) // 8) * 8)
    mp = _round_up(mp, tm)
    return mp, tm, tn


def _k_tile(kp):
    if kp <= 2304:
        return kp                      # one resident weight block
    for tk in (2304, 2048, 1536, 1280, 1152, 1024, 896, 768, 640, 512,
               384, 256, 128):
        if kp % tk == 0:
            return tk
    return 128


def fused_linear_pallas(x, w, shift, residual=None, relu=True,
                        out_dtype=jnp.bfloat16):
    """y = [relu]((x @ w) + shift [+ residual]).

    x: (M, K') bf16; w: (K, N) bf16 (BN scale folded, K pre-padded, K' <= K);
    shift: (1, N) f32; residual: (M, N) bf16.  Output: (M, N) bf16.
    """
    m = x.shape[0]
    kp, n = w.shape
    if x.shape[1] < kp:                               # only conv1: 147 -> 256
        x = jnp.pad(x, ((0, 0), (0, kp - x.shape[1])))

    mp, tm, tn = _tiles(m, n)
    tk = _k_tile(kp)
    if mp != m:
        x = jnp.pad(x, ((0, mp - m), (0, 0)))

    k_blocks = kp // tk
    multi_k = k_blocks > 1
    has_res = residual is not None

    args = [x, w, shift]
    in_specs = [
        pl.BlockSpec((tm, tk), lambda i, j, kk: (i, kk)),
        pl.BlockSpec((tk, tn), lambda i, j, kk: (kk, j)),
        pl.BlockSpec((1, tn), lambda i, j, kk: (0, j)),
    ]
    if has_res:
        res = residual
        if mp != m:
            res = jnp.pad(res, ((0, mp - m), (0, 0)))
        args.append(res)
        in_specs.append(pl.BlockSpec((tm, tn), lambda i, j, kk: (i, j)))

    kernel = functools.partial(_fused_matmul_kernel, apply_relu=relu,
                               has_res=has_res, multi_k=multi_k)
    out = pl.pallas_call(
        kernel,
        out_shape=jax.ShapeDtypeStruct((mp, n), out_dtype),
        grid=(mp // tm, n // tn, k_blocks),
        in_specs=in_specs,
        out_specs=pl.BlockSpec((tm, tn), lambda i, j, kk: (i, j)),
        scratch_shapes=([pltpu.VMEM((tm, tn), jnp.float32)] if multi_k else []),
        compiler_params=pltpu.CompilerParams(
            dimension_semantics=("parallel", "parallel", "arbitrary")),
    )(*args)
    return out[:m] if mp != m else out


def fused_linear_ref(x, w, shift, residual=None, relu=True,
                     out_dtype=jnp.bfloat16):
    """Pure-JAX reference mirroring the fused kernel (same bf16 operands)."""
    kp = w.shape[0]
    if x.shape[1] < kp:
        x = jnp.pad(x, ((0, 0), (0, kp - x.shape[1])))
    y = jnp.dot(x, w, preferred_element_type=jnp.float32) + shift
    if residual is not None:
        y = y + residual.astype(jnp.float32)
    if relu:
        y = jnp.maximum(y, 0.0)
    return y.astype(out_dtype)


# ----------------------------------------------------------------------------
# Fused fc (512 -> 1000, padded 1024) + fc1 (-> 128): one kernel, intermediate
# stays in VMEM / registers.
# ----------------------------------------------------------------------------

def _fc_pair_kernel(x_ref, w0_ref, b0_ref, w1_ref, b1_ref, o_ref):
    h = jnp.dot(x_ref[...], w0_ref[...], preferred_element_type=jnp.float32)
    h = (h + b0_ref[...]).astype(jnp.bfloat16)
    y = jnp.dot(h, w1_ref[...], preferred_element_type=jnp.float32) + b1_ref[...]
    o_ref[...] = y


def fc_pair_pallas(x, p):
    b = x.shape[0]
    bp = _round_up(max(b, 8), 8)
    if bp != b:
        x = jnp.pad(x, ((0, bp - b), (0, 0)))
    n_out = p["w1"].shape[1]
    out = pl.pallas_call(
        _fc_pair_kernel,
        out_shape=jax.ShapeDtypeStruct((bp, n_out), jnp.float32),
        grid=(1,),
        in_specs=[pl.BlockSpec(x.shape, lambda i: (0, 0)),
                  pl.BlockSpec(p["w0"].shape, lambda i: (0, 0)),
                  pl.BlockSpec(p["b0"].shape, lambda i: (0, 0)),
                  pl.BlockSpec(p["w1"].shape, lambda i: (0, 0)),
                  pl.BlockSpec(p["b1"].shape, lambda i: (0, 0))],
        out_specs=pl.BlockSpec((bp, n_out), lambda i: (0, 0)),
    )(x, p["w0"], p["b0"], p["w1"], p["b1"])
    return out[:b] if bp != b else out


def fc_pair_ref(x, p):
    h = jnp.dot(x, p["w0"], preferred_element_type=jnp.float32) + p["b0"]
    h = h.astype(jnp.bfloat16)
    return jnp.dot(h, p["w1"], preferred_element_type=jnp.float32) + p["b1"]


# ----------------------------------------------------------------------------
# Plain-JAX glue: im2col, maxpool (layout plumbing only)
# ----------------------------------------------------------------------------

def im2col(x, kh, kw, stride, pad):
    """x: (B, H, W, C) NHWC bf16 -> (B*Ho*Wo, kh*kw*C) patches, plus (Ho, Wo)."""
    b, h, w, c = x.shape
    ho = (h + 2 * pad - kh) // stride + 1
    wo = (w + 2 * pad - kw) // stride + 1
    xp = jnp.pad(x, ((0, 0), (pad, pad), (pad, pad), (0, 0))) if pad else x
    taps = []
    for dy in range(kh):
        for dx in range(kw):
            taps.append(lax.slice(
                xp,
                (0, dy, dx, 0),
                (b, dy + (ho - 1) * stride + 1, dx + (wo - 1) * stride + 1, c),
                (1, stride, stride, 1)))
    patches = jnp.concatenate(taps, axis=-1)           # (B, Ho, Wo, kh*kw*C)
    return patches.reshape(b * ho * wo, kh * kw * c), ho, wo


def maxpool_3x3_s2_p1(x):
    """PyTorch MaxPool2d(kernel_size=3, stride=2, padding=1) on NHWC."""
    return lax.reduce_window(
        x, jnp.array(-jnp.inf, x.dtype), lax.max,
        window_dimensions=(1, 3, 3, 1),
        window_strides=(1, 2, 2, 1),
        padding=((0, 0), (1, 1), (1, 1), (0, 0)))


# ----------------------------------------------------------------------------
# Layers built on the fused kernel
# ----------------------------------------------------------------------------

def conv_bn(x, p, stride, relu, linear_fn, residual=None):
    """x: (B, H, W, Cin) NHWC bf16. Conv (bias=False) + BN folded + opt res + relu."""
    b = x.shape[0]
    patches, ho, wo = im2col(x, p["kh"], p["kw"], stride, p["pad"])
    res_rows = None
    if residual is not None:
        res_rows = residual.reshape(b * ho * wo, residual.shape[-1])
    y = linear_fn(patches, p["w"], p["shift"], residual=res_rows, relu=relu)
    return y.reshape(b, ho, wo, -1)


def basic_block(x, p, linear_fn):
    identity = x
    out = conv_bn(x, p["conv1"], p["stride"], True, linear_fn)
    if "downsample" in p:
        identity = conv_bn(x, p["downsample"], p["stride"], False, linear_fn)
    # conv2 -> bn2 -> (+identity) -> relu, all fused in one kernel call.
    out = conv_bn(out, p["conv2"], 1, True, linear_fn, residual=identity)
    return out


# ----------------------------------------------------------------------------
# Parameters (deterministic init mirroring the PyTorch module's shapes)
# ----------------------------------------------------------------------------

def make_params(key):
    keys = iter(jax.random.split(key, 256))

    def nk():
        return next(keys)

    eps = 1e-5

    def conv_bn_p(cin, cout, kh, pad, cin_pad=None, cout_pad=None, k_pad_to=0):
        """Conv weight with inference-mode BN folded in (w *= scale); padded
        input/output channels carry exact zeros (lane-dense store trick)."""
        cin_pad = cin_pad or cin
        cout_pad = cout_pad or cout
        std = math.sqrt(2.0 / (cin * kh * kh))
        w = std * jax.random.normal(nk(), (kh, kh, cin, cout), jnp.float32)
        gamma = jax.random.uniform(nk(), (cout,), jnp.float32, 0.8, 1.2)
        beta = 0.1 * jax.random.normal(nk(), (cout,), jnp.float32)
        mean = 0.1 * jax.random.normal(nk(), (cout,), jnp.float32)
        var = jax.random.uniform(nk(), (cout,), jnp.float32, 0.8, 1.2)
        scale = gamma / jnp.sqrt(var + eps)
        shift = beta - mean * scale
        w = w * scale                                      # fold BN scale
        wp = jnp.zeros((kh, kh, cin_pad, cout_pad), jnp.float32)
        wp = wp.at[:, :, :cin, :cout].set(w)
        wk = wp.reshape(kh * kh * cin_pad, cout_pad)
        if k_pad_to > wk.shape[0]:
            wk = jnp.pad(wk, ((0, k_pad_to - wk.shape[0]), (0, 0)))
        shift_p = jnp.zeros((1, cout_pad), jnp.float32).at[0, :cout].set(shift)
        return dict(w=wk.astype(jnp.bfloat16), shift=shift_p,
                    kh=kh, kw=kh, pad=pad)

    def block_p(cin, cout, stride, cin_pad, cout_pad):
        p = dict(stride=stride,
                 conv1=conv_bn_p(cin, cout, 3, 1, cin_pad, cout_pad),
                 conv2=conv_bn_p(cout, cout, 3, 1, cout_pad, cout_pad))
        if stride != 1 or cin != cout:
            p["downsample"] = conv_bn_p(cin, cout, 1, 0, cin_pad, cout_pad)
        return p

    def layer_p(cin, cout, stride, cin_pad, cout_pad):
        return [block_p(cin, cout, stride, cin_pad, cout_pad),
                block_p(cout, cout, 1, cout_pad, cout_pad)]

    def fc_pair_p():
        b0 = 1.0 / math.sqrt(512)
        w0 = jax.random.uniform(nk(), (512, 1000), jnp.float32, -b0, b0)
        bias0 = jax.random.uniform(nk(), (1, 1000), jnp.float32, -b0, b0)
        b1 = 1.0 / math.sqrt(1000)
        w1 = jax.random.uniform(nk(), (1000, 128), jnp.float32, -b1, b1)
        bias1 = jax.random.uniform(nk(), (1, 128), jnp.float32, -b1, b1)
        # fc lane-padded 1000 -> 1024; zero columns consumed by zero fc1 rows.
        w0 = jnp.pad(w0, ((0, 0), (0, 24)))
        bias0 = jnp.pad(bias0, ((0, 0), (0, 24)))
        w1 = jnp.pad(w1, ((0, 24), (0, 0)))
        return dict(w0=w0.astype(jnp.bfloat16), b0=bias0,
                    w1=w1.astype(jnp.bfloat16), b1=bias1)

    return dict(
        # conv1: Cout 64 padded to 128 lanes; K 147 padded to 256.
        conv1=conv_bn_p(3, 64, 7, 3, cin_pad=3, cout_pad=128, k_pad_to=256),
        layer1=layer_p(64, 64, 1, 128, 128),
        layer2=layer_p(64, 128, 2, 128, 128),
        layer3=layer_p(128, 256, 2, 128, 256),
        layer4=layer_p(256, 512, 2, 256, 512),
        fc_pair=fc_pair_p(),
    )


# ----------------------------------------------------------------------------
# ResEncoder.forward
# ----------------------------------------------------------------------------

def res_encoder_forward(params, input_view, use_pallas=True):
    linear_fn = fused_linear_pallas if use_pallas else fused_linear_ref

    # NCHW -> NHWC, bf16 activation path (f32 accumulation inside kernels).
    x = jnp.transpose(input_view, (0, 2, 3, 1)).astype(jnp.bfloat16)

    feat0 = conv_bn(x, params["conv1"], 1, True, linear_fn)   # conv1+bn1+relu
    h = maxpool_3x3_s2_p1(feat0)

    feat1 = h
    for blk in params["layer1"]:
        feat1 = basic_block(feat1, blk, linear_fn)
    feat2 = feat1
    for blk in params["layer2"]:
        feat2 = basic_block(feat2, blk, linear_fn)
    feat3 = feat2
    for blk in params["layer3"]:
        feat3 = basic_block(feat3, blk, linear_fn)
    feat4 = feat3
    for blk in params["layer4"]:
        feat4 = basic_block(feat4, blk, linear_fn)

    pooled = jnp.mean(feat4.astype(jnp.float32), axis=(1, 2))  # avgpool (1,1)
    pooled = pooled.astype(jnp.bfloat16)
    if use_pallas:
        featvec = fc_pair_pallas(pooled, params["fc_pair"])    # (B, 128) f32
    else:
        featvec = fc_pair_ref(pooled, params["fc_pair"])

    feats = (feat0, feat1, feat2, feat3, feat4)
    featmap_list = [
        jnp.transpose(f[..., :c], (0, 3, 1, 2)).astype(jnp.float32)
        for f, c in zip(feats, FEAT_CHANNELS)]
    return featvec, featmap_list


# ----------------------------------------------------------------------------
if __name__ == "__main__":
    key = jax.random.PRNGKey(0)
    k_params, k_x = jax.random.split(key)
    params = make_params(k_params)

    B, H, W = 2, 16, 16
    input_view = jax.random.normal(k_x, (B, 3, H, W), jnp.float32)

    featvec, featmaps = res_encoder_forward(params, input_view, use_pallas=True)
    featvec, featmaps = jax.block_until_ready((featvec, featmaps))

    featvec_ref, featmaps_ref = res_encoder_forward(params, input_view,
                                                    use_pallas=False)
    featvec_ref, featmaps_ref = jax.block_until_ready((featvec_ref, featmaps_ref))

    expected = [(B, 64, 16, 16), (B, 64, 8, 8), (B, 128, 4, 4),
                (B, 256, 2, 2), (B, 512, 1, 1)]
    assert featvec.shape == (B, 128), featvec.shape
    for fm, shp in zip(featmaps, expected):
        assert fm.shape == shp, (fm.shape, shp)

    def max_rel_err(a, b):
        a = jnp.asarray(a, jnp.float32)
        b = jnp.asarray(b, jnp.float32)
        return float(jnp.max(jnp.abs(a - b)) / (jnp.max(jnp.abs(b)) + 1e-6))

    err_v = max_rel_err(featvec, featvec_ref)
    assert err_v < 3e-2, f"featvec Pallas/ref mismatch: {err_v}"
    for i, (fm, fr) in enumerate(zip(featmaps, featmaps_ref)):
        e = max_rel_err(fm, fr)
        assert e < 3e-2, f"featmap {i} Pallas/ref mismatch: {e}"

    print("KERNEL_OK")
</pallas_src>

<mosaic_0001>
module attributes {stable_mosaic.version = 11 : i64} {
  func.func @_fused_matmul_kernel(%arg0: i32, %arg1: i32, %arg2: i32, %arg3: memref<256x256xbf16, #tpu.memory_space<vmem>>, %arg4: memref<256x128xbf16, #tpu.memory_space<vmem>>, %arg5: memref<1x128xf32, #tpu.memory_space<vmem>>, %arg6: memref<256x128xbf16, #tpu.memory_space<vmem>>) attributes {dimension_semantics = [#tpu.dimension_semantics<parallel>, #tpu.dimension_semantics<parallel>, #tpu.dimension_semantics<arbitrary>], iteration_bounds = array<i64: 2, 1, 1>, scalar_prefetch = 0 : i64, scratch_operands = 0 : i64, tpu.core_type = #tpu.core_type<tc>, window_params = [{transform_indices = @transform_0, window_bounds = array<i64: 256, 256>}, {transform_indices = @transform_1, window_bounds = array<i64: 256, 128>}, {transform_indices = @transform_2, window_bounds = array<i64: 1, 128>}, {transform_indices = @transform_3, window_bounds = array<i64: 256, 128>}]} {
    %c0 = arith.constant 0 : index
    %c0_0 = arith.constant 0 : index
    %0 = vector.load %arg3[%c0, %c0_0] : memref<256x256xbf16, #tpu.memory_space<vmem>>, vector<256x256xbf16>
    %c0_1 = arith.constant 0 : index
    %c0_2 = arith.constant 0 : index
    %1 = vector.load %arg4[%c0_1, %c0_2] : memref<256x128xbf16, #tpu.memory_space<vmem>>, vector<256x128xbf16>
    %cst = arith.constant dense<0.000000e+00> : vector<256x128xf32>
    %2 = tpu.matmul %0, %1, %cst {dimension_numbers = #tpu.dot_dimension_numbers<[1], [0], [0], [1], [0, 0, 1, 1], [], []>} : vector<256x256xbf16>, vector<256x128xbf16>, vector<256x128xf32> -> vector<256x128xf32>
    %c0_3 = arith.constant 0 : index
    %c0_4 = arith.constant 0 : index
    %3 = vector.load %arg5[%c0_3, %c0_4] : memref<1x128xf32, #tpu.memory_space<vmem>>, vector<1x128xf32>
    %4 = vector.broadcast %3 : vector<1x128xf32> to vector<256x128xf32>
    %5 = arith.addf %2, %4 : vector<256x128xf32>
    %cst_5 = arith.constant 0.000000e+00 : f32
    %6 = vector.broadcast %cst_5 : f32 to vector<256x128xf32>
    %7 = arith.maximumf %5, %6 : vector<256x128xf32>
    %8 = arith.truncf %7 : vector<256x128xf32> to vector<256x128xbf16>
    %c0_6 = arith.constant 0 : index
    %c0_7 = arith.constant 0 : index
    %9 = vector.load %arg6[%c0_6, %c0_7] : memref<256x128xbf16, #tpu.memory_space<vmem>>, vector<256x128xbf16>
    tpu.vector_store %arg6[%c0_6, %c0_7], %8 {strides = array<i32>} : memref<256x128xbf16, #tpu.memory_space<vmem>>, vector<256x128xbf16>,
    return
  }
  func.func @transform_0(%arg0: i32, %arg1: i32, %arg2: i32) -> (i32, i32) {
    %c0_i32 = arith.constant 0 : i32
    return %arg0, %arg2 : i32, i32
  }
  func.func @transform_1(%arg0: i32, %arg1: i32, %arg2: i32) -> (i32, i32) {
    %c0_i32 = arith.constant 0 : i32
    return %arg2, %arg1 : i32, i32
  }
  func.func @transform_2(%arg0: i32, %arg1: i32, %arg2: i32) -> (i32, i32) {
    %c0_i32 = arith.constant 0 : i32
    %c0_i32_0 = arith.constant 0 : i32
    return %c0_i32, %arg1 : i32, i32
  }
  func.func @transform_3(%arg0: i32, %arg1: i32, %arg2: i32) -> (i32, i32) {
    %c0_i32 = arith.constant 0 : i32
    return %arg0, %arg1 : i32, i32
  }
}

</mosaic_0001>

<llo_original>
// kernel: tpu_custom_call.1
$region0: #{tpu_custom_call.1}
  #allocation0 [shape = 'u32[]', space=smem, size = 0x4, offset = 0x4, fixed_abs, tag = 'smem constant byte address 0x4 - core index']
  #allocation1 [shape = 'u32[144,128]{1,0:T(1,128)}', space=vmem, size = 0x12000, scoped, tag = 'internal scratch']
  %s0 = inlined_call_operand.hbm [shape: bf16[512,256], index: 0, kind: input, shape index: {}]
  %s1 = inlined_call_operand.hbm [shape: bf16[256,128], index: 1, kind: input, shape index: {}]
  %s2 = inlined_call_operand.vmem [shape: f32[1,128], index: 2, kind: input, shape index: {}]
  %s3 = inlined_call_operand.hbm [shape: bf16[512,128], index: 3, kind: output, shape index: {}]
  %s4 = sld [smem:[#allocation0]]
  $region53: #{tpu_custom_call.1} parent=0
    _
  %s6 = ssub.s32 1, %s4
  %s7 = scalar_select 0, %s6, %s4
  $region1: #{tpu_custom_call.1} parent=0
    #allocation2 [shape = 'u8[262144]{0}', space=vmem, size = 0x40000, scoped, tag = 'input window, operand 0']
    #allocation3 [shape = 's32[2]{0}', space=sflag, size = 0x8, scoped, tag = 'scoped memory for tpu_custom_call.1']
    #allocation4 [shape = 's32[2]{0}', space=sflag, size = 0x8, scoped, tag = 'scoped memory for tpu_custom_call.1']
    #allocation5 [shape = 'u8[65536]{0}', space=vmem, size = 0x10000, scoped, tag = 'input window, operand 1, single buffered']
    #allocation6 [shape = 's32[1]{0}', space=sflag, size = 0x4, scoped, tag = 'scoped memory for tpu_custom_call.1']
    #allocation7 [shape = 'u8[131072]{0}', space=vmem, size = 0x20000, scoped, tag = 'output window, operand 0']
    %8 = vsyncpa [#allocation3], 0
    %s9 = scalar_lea.sflag [#allocation3], 1
    %10 = vsyncpa %s9, 0
    %11 = vsyncpa [#allocation6], 0
    %12 = vsyncpa [#allocation4], 0
    %s13 = scalar_lea.sflag [#allocation4], 1
    %14 = vsyncpa %s13, 0
    loop: start=0, step=1, limit=4
    $region2: #{tpu_custom_call.1} parent=1 // loop_pre_header
      _
    $region3: #{tpu_custom_call.1} parent=1 // loop_header
      %s16 = sphi 0, %s20
      %p17 = scmp.ge.s32.totalorder %s16, 4
      %s23 = sphi 0, %s42
      %s24 = sphi 0, %s38
      %s25 = sphi 0, %s34
      %s26 = sphi 0, %s23
      %s27 = sphi 0, %s24
      %s28 = sphi 0, %s25
      %s29 = sphi 0, %s26
      %s30 = sphi 0, %s27
      %s31 = sphi 0, %s28
      %s47 = sphi 0, %s49
      %s50 = sphi 0, %s47
      %s51 = sphi 0, %s50
      %s67 = sphi 0, %s51
      %s75 = sphi 0, %s77
      %s78 = sphi 0, %s75
      %s79 = sphi 0, %s78
      %s95 = sphi 0, %s79
      %s101 = sphi 0, %s103
      %s104 = sphi 0, %s101
      %s105 = sphi 0, %s104
      %s121 = sphi 0, %s105
      %s129 = sphi 0, %s131
      %s132 = sphi 0, %s129
      %s133 = sphi 0, %s132
      %s149 = sphi 0, %s133
    $region4: #{tpu_custom_call.1} parent=1 // loop_header_branch
      %19 = sbr.rel (%p17) target = $region8
    $region5: #{tpu_custom_call.1} parent=1 // loop_body
      %s21 = ssub.s32 %s16, 1
      %s22 = ssub.s32 %s16, 2
      %s32 = sadd.s32 1, %s25
      %p33 = scmp.ge.s32.totalorder %s32, 1
      %s34 = scalar_select %p33, 0, %s32
      %s35 = sadd.s32 1, %s24
      %s36 = scalar_select %p33, %s35, %s24
      %p37 = scmp.ge.s32.totalorder %s36, 1
      %s38 = scalar_select %p37, 0, %s36
      %s39 = sadd.s32 1, %s23
      %s40 = scalar_select %p37, %s39, %s23
      %p41 = scmp.ge.s32.totalorder %s40, 2
      %s42 = scalar_select %p41, 0, %s40
      %s43 = ssub.s32 %s23, %s42
      %s44 = ssub.s32 %s25, %s34
      %s45 = sor.u32 %s43, %s44
      %p46 = scmp.eq.s32.totalorder %s45, 0
      %s48 = sadd.s32 %s47, 1
      %s49 = scalar_select %p46, %s47, %s48
      %p52 = pneg %p46
      %p53 = scmp.eq.s32.totalorder %s16, 1
      %p54 = por %p52, %p53
      %p55 = scmp.ne.s32.totalorder %s47, %s50
      %p56 = scmp.eq.s32.totalorder %s16, 0
      %p57 = por %p55, %p56
      %p58 = scmp.ne.s32.totalorder %s47, %s50
      %p59 = scmp.eq.s32.totalorder %s21, 1
      %p60 = por %p58, %p59
      %p61 = scmp.ne.s32.totalorder %s50, %s51
      %p62 = scmp.eq.s32.totalorder %s21, 0
      %p63 = por %p61, %p62
      %p64 = scmp.ne.s32.totalorder %s50, %s51
      %p65 = scmp.eq.s32.totalorder %s22, 1
      %p66 = por %p64, %p65
      %p68 = scmp.ne.s32.totalorder %s51, %s67
      %p69 = scmp.eq.s32.totalorder %s22, 0
      %p70 = por %p68, %p69
      %s71 = ssub.s32 %s25, %s34
      %s72 = ssub.s32 %s24, %s38
      %s73 = sor.u32 %s71, %s72
      %p74 = scmp.eq.s32.totalorder %s73, 0
      %s76 = sadd.s32 %s75, 1
      %s77 = scalar_select %p74, %s75, %s76
      %p80 = pneg %p74
      %p81 = scmp.eq.s32.totalorder %s16, 1
      %p82 = por %p80, %p81
      %p83 = scmp.ne.s32.totalorder %s75, %s78
      %p84 = scmp.eq.s32.totalorder %s16, 0
      %p85 = por %p83, %p84
      %p86 = scmp.ne.s32.totalorder %s75, %s78
      %p87 = scmp.eq.s32.totalorder %s21, 1
      %p88 = por %p86, %p87
      %p89 = scmp.ne.s32.totalorder %s78, %s79
      %p90 = scmp.eq.s32.totalorder %s21, 0
      %p91 = por %p89, %p90
      %p92 = scmp.ne.s32.totalorder %s78, %s79
      %p93 = scmp.eq.s32.totalorder %s22, 1
      %p94 = por %p92, %p93
      %p96 = scmp.ne.s32.totalorder %s79, %s95
      %p97 = scmp.eq.s32.totalorder %s22, 0
      %p98 = por %p96, %p97
      %s99 = ssub.s32 %s24, %s38
      %p100 = scmp.eq.s32.totalorder %s99, 0
      %s102 = sadd.s32 %s101, 1
      %s103 = scalar_select %p100, %s101, %s102
      %p106 = pneg %p100
      %p107 = scmp.eq.s32.totalorder %s16, 1
      %p108 = por %p106, %p107
      %p109 = scmp.ne.s32.totalorder %s101, %s104
      %p110 = scmp.eq.s32.totalorder %s16, 0
      %p111 = por %p109, %p110
      %p112 = scmp.ne.s32.totalorder %s101, %s104
      %p113 = scmp.eq.s32.totalorder %s21, 1
      %p114 = por %p112, %p113
      %p115 = scmp.ne.s32.totalorder %s104, %s105
      %p116 = scmp.eq.s32.totalorder %s21, 0
      %p117 = por %p115, %p116
      %p118 = scmp.ne.s32.totalorder %s104, %s105
      %p119 = scmp.eq.s32.totalorder %s22, 1
      %p120 = por %p118, %p119
      %p122 = scmp.ne.s32.totalorder %s105, %s121
      %p123 = scmp.eq.s32.totalorder %s22, 0
      %p124 = por %p122, %p123
      %s125 = ssub.s32 %s23, %s42
      %s126 = ssub.s32 %s24, %s38
      %s127 = sor.u32 %s125, %s126
      %p128 = scmp.eq.s32.totalorder %s127, 0
      %s130 = sadd.s32 %s129, 1
      %s131 = scalar_select %p128, %s129, %s130
      %p134 = pneg %p128
      %p135 = scmp.eq.s32.totalorder %s16, 1
      %p136 = por %p134, %p135
      %p137 = scmp.ne.s32.totalorder %s129, %s132
      %p138 = scmp.eq.s32.totalorder %s16, 0
      %p139 = por %p137, %p138
      %p140 = scmp.ne.s32.totalorder %s129, %s132
      %p141 = scmp.eq.s32.totalorder %s21, 1
      %p142 = por %p140, %p141
      %p143 = scmp.ne.s32.totalorder %s132, %s133
      %p144 = scmp.eq.s32.totalorder %s21, 0
      %p145 = por %p143, %p144
      %p146 = scmp.ne.s32.totalorder %s132, %s133
      %p147 = scmp.eq.s32.totalorder %s22, 1
      %p148 = por %p146, %p147
      %p150 = scmp.ne.s32.totalorder %s133, %s149
      %p151 = scmp.eq.s32.totalorder %s22, 0
      %p152 = por %p150, %p151
      %p153 = scmp.le.s32.totalorder 1, %s16
      %p154 = scmp.lt.s32.totalorder %s16, 3
      %p155 = pnand %p153, %p154
      %p156 = pneg %p155
      // Predicated region
      $region9: #{tpu_custom_call.1} parent=5 // pred_check
        _
      $region10: #{tpu_custom_call.1} parent=5 // pred_check_branch
        %158 = sbr.rel (%p155) target = $region12
      $region11: #{tpu_custom_call.1} parent=5 // pred_region
        %s159 = ssub.s32 %s16, 1
        // Predicated region
        $region13: #{tpu_custom_call.1} parent=11 // pred_check
          %p160 = pneg %p91
        $region14: #{tpu_custom_call.1} parent=11 // pred_check_branch
          %162 = sbr.rel (%p160) target = $region16
        $region15: #{tpu_custom_call.1} parent=11 // pred_region
          %s163 = smul.u32 32, %s28
          %s165 = ssub.s32 2048, 2048
          %166 = vsyncadd [#allocation6], %s165
          %s167 = sadd.s32 %s27, %s163
          %s168 = smul.addr %s167, 64
          %s169 = scalar_lea.hbm %s1, %s168
          %s170 = sshll.u32 [#allocation5], 4
          %s171 = int_to_ptr.vmem [resolvable:$true] %s170
          %176 = dma.hbm_to_vmem [thread:$0]  %s169, 2048, %s171, [#allocation6], 64, 64, 4
        $region16: #{tpu_custom_call.1} parent=11 // pred_fallthru
          _
        // Predicated region
        $region17: #{tpu_custom_call.1} parent=11 // pred_check
          %p177 = pneg %p117
        $region18: #{tpu_custom_call.1} parent=11 // pred_check_branch
          %179 = sbr.rel (%p177) target = $region20
        $region19: #{tpu_custom_call.1} parent=11 // pred_region
          %p180 = scmp.lt.s32.totalorder %s27, 0
          %s181 = scalar_select %p180, %s27, 0
          %s182 = scalar_lea.vmem %s2, %s181
        $region20: #{tpu_custom_call.1} parent=11 // pred_fallthru
          _
      $region12: #{tpu_custom_call.1} parent=5 // pred_fallthru
        _
      %p183 = scmp.lt.s32.totalorder %s16, 2
      // Predicated region
      $region21: #{tpu_custom_call.1} parent=5 // pred_check
        %p184 = pneg %p183
      $region22: #{tpu_custom_call.1} parent=5 // pred_check_branch
        %186 = sbr.rel (%p184) target = $region24
      $region23: #{tpu_custom_call.1} parent=5 // pred_region
        // Predicated region
        $region25: #{tpu_custom_call.1} parent=23 // pred_check
          %p187 = pneg %p57
        $region26: #{tpu_custom_call.1} parent=23 // pred_check_branch
          %189 = sbr.rel (%p187) target = $region28
        $region27: #{tpu_custom_call.1} parent=23 // pred_region
          %s190 = sand.u32 %s47, 1
          %s191 = scalar_lea.sflag [#allocation3], %s190
          %s192 = sand.u32 %s47, 1
          %s193 = smul.addr %s192, 256
          %s194 = scalar_lea.vmem [#allocation2], %s193
          %s195 = smul.u32 32, %s23
          %s196 = smul.u32 2, %s25
          %s198 = ssub.s32 4096, 4096
          %199 = vsyncadd %s191, %s198
          %s200 = smul.addr %s195, 2
          %s201 = sadd.s32 %s196, %s200
          %s202 = smul.addr %s201, 64
          %s203 = scalar_lea.hbm %s0, %s202
          %s204 = sshll.u32 %s194, 4
          %s205 = int_to_ptr.vmem [resolvable:$true] %s204
          %210 = dma.hbm_to_vmem [thread:$0]  %s203, 4096, %s205, %s191, 128, 128, 8
        $region28: #{tpu_custom_call.1} parent=23 // pred_fallthru
          _
      $region24: #{tpu_custom_call.1} parent=5 // pred_fallthru
        _
      %p211 = scmp.le.s32.totalorder 1, %s16
      %p212 = scmp.lt.s32.totalorder %s16, 3
      %p213 = pnand %p211, %p212
      %p214 = pneg %p213
      // Predicated region
      $region29: #{tpu_custom_call.1} parent=5 // pred_check
        _
      $region30: #{tpu_custom_call.1} parent=5 // pred_check_branch
        %216 = sbr.rel (%p213) target = $region32
      $region31: #{tpu_custom_call.1} parent=5 // pred_region
        %s217 = ssub.s32 %s16, 1
        %s218 = sand.u32 %s50, 1
        %s219 = scalar_lea.sflag [#allocation3], %s218
        %s220 = sand.u32 %s50, 1
        %s221 = smul.addr %s220, 256
        %s222 = scalar_lea.vmem [#allocation2], %s221
        // Predicated region
        $region33: #{tpu_custom_call.1} parent=31 // pred_check
          %p223 = pneg %p63
        $region34: #{tpu_custom_call.1} parent=31 // pred_check_branch
          %225 = sbr.rel (%p223) target = $region36
        $region35: #{tpu_custom_call.1} parent=31 // pred_region
          %226 = dma.done %s219, 4096
        $region36: #{tpu_custom_call.1} parent=31 // pred_fallthru
          _
        // Predicated region
        $region37: #{tpu_custom_call.1} parent=31 // pred_check
          %p227 = pneg %p91
        $region38: #{tpu_custom_call.1} parent=31 // pred_check_branch
          %229 = sbr.rel (%p227) target = $region40
        $region39: #{tpu_custom_call.1} parent=31 // pred_region
          %230 = dma.done [#allocation6], 2048
        $region40: #{tpu_custom_call.1} parent=31 // pred_fallthru
          _
        %s231 = sand.u32 %s50, 1
        %s232 = scalar_lea.sflag [#allocation3], %s231
        %s233 = sand.u32 %s50, 1
        %s234 = smul.addr %s233, 256
        %s235 = scalar_lea.vmem [#allocation2], %s234
        %p236 = pneg %p63
        %p237 = pneg %p60
        %p238 = pneg %p91
        %p239 = pneg %p88
        %p240 = scmp.lt.s32.totalorder %s27, 0
        %s241 = scalar_select %p240, %s27, 0
        %s242 = scalar_lea.vmem %s2, %s241
        %p243 = pneg %p117
        %p244 = pneg %p114
        %p245 = pneg %p145
        %p246 = pneg %p142
        %s247 = sand.u32 %s132, 1
        %s248 = scalar_lea.sflag [#allocation4], %s247
        %s249 = sand.u32 %s132, 1
        %s250 = smul.addr %s249, 128
        %s251 = scalar_lea.vmem [#allocation7], %s250
        %s252 = smul.u32 32, %s26
        %s253 = smul.u32 2, %s28
        %s254 = smul.u32 32, %s28
        %p255 = scmp.lt.s32.totalorder %s27, 0
        %s256 = scalar_select %p255, %s27, 0
        %s257 = scalar_lea.vmem %s2, %s256
        %s258 = smul.u32 32, %s26
        %v260 = vld [vmem:[%s222] sm:$0xff]
        %v261 = vld [vmem:[%s222 + $0x8] sm:$0xff]
        %v262 = vld [vmem:[%s222 + $0x10] sm:$0xff]
        %v263 = vld [vmem:[%s222 + $0x18] sm:$0xff]
        %v264 = vld [vmem:[%s222 + $0x20] sm:$0xff]
        %v265 = vld [vmem:[%s222 + $0x28] sm:$0xff]
        %v266 = vld [vmem:[%s222 + $0x30] sm:$0xff]
        %v267 = vld [vmem:[%s222 + $0x38] sm:$0xff]
        %v268 = vld [vmem:[%s222 + $0x40] sm:$0xff]
        %v269 = vld [vmem:[%s222 + $0x48] sm:$0xff]
        %v270 = vld [vmem:[%s222 + $0x50] sm:$0xff]
        %v271 = vld [vmem:[%s222 + $0x58] sm:$0xff]
        %v272 = vld [vmem:[%s222 + $0x60] sm:$0xff]
        %v273 = vld [vmem:[%s222 + $0x68] sm:$0xff]
        %v274 = vld [vmem:[%s222 + $0x70] sm:$0xff]
        %v275 = vld [vmem:[%s222 + $0x78] sm:$0xff]
        %v276 = vld [vmem:[%s222 + $0x80] sm:$0xff]
        %v277 = vld [vmem:[%s222 + $0x88] sm:$0xff]
        %v278 = vld [vmem:[%s222 + $0x90] sm:$0xff]
        %v279 = vld [vmem:[%s222 + $0x98] sm:$0xff]
        %v280 = vld [vmem:[%s222 + $0xa0] sm:$0xff]
        %v281 = vld [vmem:[%s222 + $0xa8] sm:$0xff]
        %v282 = vld [vmem:[%s222 + $0xb0] sm:$0xff]
        %v283 = vld [vmem:[%s222 + $0xb8] sm:$0xff]
        %v284 = vld [vmem:[%s222 + $0xc0] sm:$0xff]
        %v285 = vld [vmem:[%s222 + $0xc8] sm:$0xff]
        %v286 = vld [vmem:[%s222 + $0xd0] sm:$0xff]
        %v287 = vld [vmem:[%s222 + $0xd8] sm:$0xff]
        %v288 = vld [vmem:[%s222 + $0xe0] sm:$0xff]
        %v289 = vld [vmem:[%s222 + $0xe8] sm:$0xff]
        %v290 = vld [vmem:[%s222 + $0xf0] sm:$0xff]
        %v291 = vld [vmem:[%s222 + $0xf8] sm:$0xff]
        %v292 = vld [vmem:[#allocation5] sm:$0xf]
        %v293 = vld [vmem:[#allocation5 + $0x4] sm:$0xf]
        %v294 = vld [vmem:[#allocation5 + $0x8] sm:$0xf]
        %v295 = vld [vmem:[#allocation5 + $0xc] sm:$0xf]
        %v296 = vld [vmem:[#allocation5 + $0x10] sm:$0xf]
        %v297 = vld [vmem:[#allocation5 + $0x14] sm:$0xf]
        %v298 = vld [vmem:[#allocation5 + $0x18] sm:$0xf]
        %v299 = vld [vmem:[#allocation5 + $0x1c] sm:$0xf]
        %v300 = vld [vmem:[#allocation5 + $0x20] sm:$0xf]
        %v301 = vld [vmem:[#allocation5 + $0x24] sm:$0xf]
        %v302 = vld [vmem:[#allocation5 + $0x28] sm:$0xf]
        %v303 = vld [vmem:[#allocation5 + $0x2c] sm:$0xf]
        %v304 = vld [vmem:[#allocation5 + $0x30] sm:$0xf]
        %v305 = vld [vmem:[#allocation5 + $0x34] sm:$0xf]
        %v306 = vld [vmem:[#allocation5 + $0x38] sm:$0xf]
        %v307 = vld [vmem:[#allocation5 + $0x3c] sm:$0xf]
        %v308 = vld [vmem:[#allocation5 + $0x40] sm:$0xf]
        %v309 = vld [vmem:[#allocation5 + $0x44] sm:$0xf]
        %v310 = vld [vmem:[#allocation5 + $0x48] sm:$0xf]
        %v311 = vld [vmem:[#allocation5 + $0x4c] sm:$0xf]
        %v312 = vld [vmem:[#allocation5 + $0x50] sm:$0xf]
        %v313 = vld [vmem:[#allocation5 + $0x54] sm:$0xf]
        %v314 = vld [vmem:[#allocation5 + $0x58] sm:$0xf]
        %v315 = vld [vmem:[#allocation5 + $0x5c] sm:$0xf]
        %v316 = vld [vmem:[#allocation5 + $0x60] sm:$0xf]
        %v317 = vld [vmem:[#allocation5 + $0x64] sm:$0xf]
        %v318 = vld [vmem:[#allocation5 + $0x68] sm:$0xf]
        %v319 = vld [vmem:[#allocation5 + $0x6c] sm:$0xf]
        %v320 = vld [vmem:[#allocation5 + $0x70] sm:$0xf]
        %v321 = vld [vmem:[#allocation5 + $0x74] sm:$0xf]
        %v322 = vld [vmem:[#allocation5 + $0x78] sm:$0xf]
        %v323 = vld [vmem:[#allocation5 + $0x7c] sm:$0xf]
        %v324 = vld [vmem:[%s257] sm:$0x1]
        %v326 = vlaneseq
        %v327 = vshrl.u32 %v326, 7
        %v328 = vsub.s32 0, %v327
        %v329 = vrot.slane %v324, %v328
        %v363 = vunpack.c.l.b16 %v260
        %v364 = vunpack.c.h.b16 %v260
        %v365 = vunpack.c.l.b16 %v261
        %v366 = vunpack.c.h.b16 %v261
        %v367 = vunpack.c.l.b16 %v262
        %v368 = vunpack.c.h.b16 %v262
        %v369 = vunpack.c.l.b16 %v263
        %v370 = vunpack.c.h.b16 %v263
        %v371 = vunpack.c.l.b16 %v264
        %v372 = vunpack.c.h.b16 %v264
        %v373 = vunpack.c.l.b16 %v265
        %v374 = vunpack.c.h.b16 %v265
        %v375 = vunpack.c.l.b16 %v266
        %v376 = vunpack.c.h.b16 %v266
        %v377 = vunpack.c.l.b16 %v267
        %v378 = vunpack.c.h.b16 %v267
        %v379 = vunpack.c.l.b16 %v268
        %v380 = vunpack.c.h.b16 %v268
        %v381 = vunpack.c.l.b16 %v269
        %v382 = vunpack.c.h.b16 %v269
        %v383 = vunpack.c.l.b16 %v270
        %v384 = vunpack.c.h.b16 %v270
        %v385 = vunpack.c.l.b16 %v271
        %v386 = vunpack.c.h.b16 %v271
        %v387 = vunpack.c.l.b16 %v272
        %v388 = vunpack.c.h.b16 %v272
        %v389 = vunpack.c.l.b16 %v273
        %v390 = vunpack.c.h.b16 %v273
        %v391 = vunpack.c.l.b16 %v274
        %v392 = vunpack.c.h.b16 %v274
        %v393 = vunpack.c.l.b16 %v275
        %v394 = vunpack.c.h.b16 %v275
        %v395 = vunpack.c.l.b16 %v276
        %v396 = vunpack.c.h.b16 %v276
        %v397 = vunpack.c.l.b16 %v277
        %v398 = vunpack.c.h.b16 %v277
        %v399 = vunpack.c.l.b16 %v278
        %v400 = vunpack.c.h.b16 %v278
        %v401 = vunpack.c.l.b16 %v279
        %v402 = vunpack.c.h.b16 %v279
        %v403 = vunpack.c.l.b16 %v280
        %v404 = vunpack.c.h.b16 %v280
        %v405 = vunpack.c.l.b16 %v281
        %v406 = vunpack.c.h.b16 %v281
        %v407 = vunpack.c.l.b16 %v282
        %v408 = vunpack.c.h.b16 %v282
        %v409 = vunpack.c.l.b16 %v283
        %v410 = vunpack.c.h.b16 %v283
        %v411 = vunpack.c.l.b16 %v284
        %v412 = vunpack.c.h.b16 %v284
        %v413 = vunpack.c.l.b16 %v285
        %v414 = vunpack.c.h.b16 %v285
        %v415 = vunpack.c.l.b16 %v286
        %v416 = vunpack.c.h.b16 %v286
        %v417 = vunpack.c.l.b16 %v287
        %v418 = vunpack.c.h.b16 %v287
        %v419 = vunpack.c.l.b16 %v288
        %v420 = vunpack.c.h.b16 %v288
        %v421 = vunpack.c.l.b16 %v289
        %v422 = vunpack.c.h.b16 %v289
        %v423 = vunpack.c.l.b16 %v290
        %v424 = vunpack.c.h.b16 %v290
        %v425 = vunpack.c.l.b16 %v291
        %v426 = vunpack.c.h.b16 %v291
        %v427 = vpack.c.b16 %v365, %v363
        %v428 = vpack.c.b16 %v366, %v364
        %v429 = vpack.c.b16 %v369, %v367
        %v430 = vpack.c.b16 %v370, %v368
        %v431 = vpack.c.b16 %v373, %v371
        %v432 = vpack.c.b16 %v374, %v372
        %v433 = vpack.c.b16 %v377, %v375
        %v434 = vpack.c.b16 %v378, %v376
        %v435 = vpack.c.b16 %v381, %v379
        %v436 = vpack.c.b16 %v382, %v380
        %v437 = vpack.c.b16 %v385, %v383
        %v438 = vpack.c.b16 %v386, %v384
        %v439 = vpack.c.b16 %v389, %v387
        %v440 = vpack.c.b16 %v390, %v388
        %v441 = vpack.c.b16 %v393, %v391
        %v442 = vpack.c.b16 %v394, %v392
        %v443 = vpack.c.b16 %v397, %v395
        %v444 = vpack.c.b16 %v398, %v396
        %v445 = vpack.c.b16 %v401, %v399
        %v446 = vpack.c.b16 %v402, %v400
        %v447 = vpack.c.b16 %v405, %v403
        %v448 = vpack.c.b16 %v406, %v404
        %v449 = vpack.c.b16 %v409, %v407
        %v450 = vpack.c.b16 %v410, %v408
        %v451 = vpack.c.b16 %v413, %v411
        %v452 = vpack.c.b16 %v414, %v412
        %v453 = vpack.c.b16 %v417, %v415
        %v454 = vpack.c.b16 %v418, %v416
        %v455 = vpack.c.b16 %v421, %v419
        %v456 = vpack.c.b16 %v422, %v420
        %v457 = vpack.c.b16 %v425, %v423
        %v458 = vpack.c.b16 %v426, %v424
        %v523 = vunpack.c.l.b16 %v292
        %v524 = vunpack.c.l.b16 %v293
        %v525 = vunpack.c.l.b16 %v294
        %v526 = vunpack.c.l.b16 %v295
        %v527 = vunpack.c.l.b16 %v296
        %v528 = vunpack.c.l.b16 %v297
        %v529 = vunpack.c.l.b16 %v298
        %v530 = vunpack.c.l.b16 %v299
        %v531 = vunpack.c.l.b16 %v300
        %v532 = vunpack.c.l.b16 %v301
        %v533 = vunpack.c.l.b16 %v302
        %v534 = vunpack.c.l.b16 %v303
        %v535 = vunpack.c.l.b16 %v304
        %v536 = vunpack.c.l.b16 %v305
        %v537 = vunpack.c.l.b16 %v306
        %v538 = vunpack.c.l.b16 %v307
        %v539 = vunpack.c.l.b16 %v308
        %v540 = vunpack.c.l.b16 %v309
        %v541 = vunpack.c.l.b16 %v310
        %v542 = vunpack.c.l.b16 %v311
        %v543 = vunpack.c.l.b16 %v312
        %v544 = vunpack.c.l.b16 %v313
        %v545 = vunpack.c.l.b16 %v314
        %v546 = vunpack.c.l.b16 %v315
        %v547 = vunpack.c.l.b16 %v316
        %v548 = vunpack.c.l.b16 %v317
        %v549 = vunpack.c.l.b16 %v318
        %v550 = vunpack.c.l.b16 %v319
        %v551 = vunpack.c.l.b16 %v320
        %v552 = vunpack.c.l.b16 %v321
        %v553 = vunpack.c.l.b16 %v322
        %v554 = vunpack.c.l.b16 %v323
        %v555 = vpack.c.b16 %v524, %v523
        %v556 = vpack.c.b16 %v526, %v525
        %v557 = vpack.c.b16 %v528, %v527
        %v558 = vpack.c.b16 %v530, %v529
        %v559 = vpack.c.b16 %v532, %v531
        %v560 = vpack.c.b16 %v534, %v533
        %v561 = vpack.c.b16 %v536, %v535
        %v562 = vpack.c.b16 %v538, %v537
        %v563 = vpack.c.b16 %v540, %v539
        %v564 = vpack.c.b16 %v542, %v541
        %v565 = vpack.c.b16 %v544, %v543
        %v566 = vpack.c.b16 %v546, %v545
        %v567 = vpack.c.b16 %v548, %v547
        %v568 = vpack.c.b16 %v550, %v549
        %v569 = vpack.c.b16 %v552, %v551
        %v570 = vpack.c.b16 %v554, %v553
        %587 = vmatprep.subr.bf16.mxu0 0
        %588 = vmatpush1.bf16.msra.mxu0 %v555
        %589 = vmatprep.subr.bf16.mxu0 0
        %590 = vmatpush1.bf16.msra.mxu0 %v556
        %591 = vmatprep.subr.bf16.mxu0 0
        %592 = vmatpush1.bf16.msra.mxu0 %v557
        %593 = vmatprep.subr.bf16.mxu0 0
        %594 = vmatpush1.bf16.msra.mxu0 %v558
        %595 = vmatprep.subr.bf16.mxu0 0
        %596 = vmatpush1.bf16.msra.mxu0 %v559
        %597 = vmatprep.subr.bf16.mxu0 0
        %598 = vmatpush1.bf16.msra.mxu0 %v560
        %599 = vmatprep.subr.bf16.mxu0 0
        %600 = vmatpush1.bf16.msra.mxu0 %v561
        %601 = vmatprep.subr.bf16.mxu0 0
        %602 = vmatpush1.bf16.msra.mxu0 %v562
        %603 = vmatprep.subr.bf16.mxu0 0
        %604 = vmatpush1.bf16.msra.mxu0 %v563
        %605 = vmatprep.subr.bf16.mxu0 0
        %606 = vmatpush1.bf16.msra.mxu0 %v564
        %607 = vmatprep.subr.bf16.mxu0 0
        %608 = vmatpush1.bf16.msra.mxu0 %v565
        %609 = vmatprep.subr.bf16.mxu0 0
        %610 = vmatpush1.bf16.msra.mxu0 %v566
        %611 = vmatprep.subr.bf16.mxu0 0
        %612 = vmatpush1.bf16.msra.mxu0 %v567
        %613 = vmatprep.subr.bf16.mxu0 0
        %614 = vmatpush1.bf16.msra.mxu0 %v568
        %615 = vmatprep.subr.bf16.mxu0 0
        %616 = vmatpush1.bf16.msra.mxu0 %v569
        %617 = vmatprep.subr.bf16.mxu0 0
        %618 = vmatpush1.bf16.msra.mxu0 %v570
        %619 = vmatprep.mubr.bf16.mxu0 %v428
        %620 = vmatmul.mubr.bf16.gmra.mrb[0].mxu0 %v427
        %v621 = vpop.f32.mrb[0].mxu0
        %v622 = vadd.f32 %v329, %v621
        %v623 = vpop.f32.mrb[0].mxu0
        %v624 = vpop.f32.mrb[0].mxu0
        %v625 = vadd.f32 %v329, %v624
        %v626 = vpop.f32.mrb[0].mxu0
        %627 = vmatprep.mubr.bf16.mxu0 %v430
        %628 = vmatmul.mubr.bf16.gmra.mrb[0].mxu0 %v429
        %v629 = vpop.f32.mrb[0].mxu0
        %v630 = vadd.f32 %v329, %v629
        %v631 = vpop.f32.mrb[0].mxu0
        %v632 = vpop.f32.mrb[0].mxu0
        %v633 = vadd.f32 %v329, %v632
        %v634 = vpop.f32.mrb[0].mxu0
        %635 = vmatprep.mubr.bf16.mxu0 %v432
        %636 = vmatmul.mubr.bf16.gmra.mrb[0].mxu0 %v431
        %v637 = vpop.f32.mrb[0].mxu0
        %v638 = vadd.f32 %v329, %v637
        %v639 = vpop.f32.mrb[0].mxu0
        %v640 = vpop.f32.mrb[0].mxu0
        %v641 = vadd.f32 %v329, %v640
        %v642 = vpop.f32.mrb[0].mxu0
        %643 = vmatprep.mubr.bf16.mxu0 %v434
        %644 = vmatmul.mubr.bf16.gmra.mrb[0].mxu0 %v433
        %v645 = vpop.f32.mrb[0].mxu0
        %v646 = vadd.f32 %v329, %v645
        %v647 = vpop.f32.mrb[0].mxu0
        %v648 = vpop.f32.mrb[0].mxu0
        %v649 = vadd.f32 %v329, %v648
        %v650 = vpop.f32.mrb[0].mxu0
        %651 = vmatprep.mubr.bf16.mxu0 %v436
        %652 = vmatmul.mubr.bf16.gmra.mrb[0].mxu0 %v435
        %v653 = vpop.f32.mrb[0].mxu0
        %v654 = vadd.f32 %v329, %v653
        %v655 = vpop.f32.mrb[0].mxu0
        %v656 = vpop.f32.mrb[0].mxu0
        %v657 = vadd.f32 %v329, %v656
        %v658 = vpop.f32.mrb[0].mxu0
        %659 = vmatprep.mubr.bf16.mxu0 %v438
        %660 = vmatmul.mubr.bf16.gmra.mrb[0].mxu0 %v437
        %v661 = vpop.f32.mrb[0].mxu0
        %v662 = vadd.f32 %v329, %v661
        %v663 = vpop.f32.mrb[0].mxu0
        %v664 = vpop.f32.mrb[0].mxu0
        %v665 = vadd.f32 %v329, %v664
        %v666 = vpop.f32.mrb[0].mxu0
        %667 = vmatprep.mubr.bf16.mxu0 %v440
        %668 = vmatmul.mubr.bf16.gmra.mrb[0].mxu0 %v439
        %v669 = vpop.f32.mrb[0].mxu0
        %v670 = vadd.f32 %v329, %v669
        %v671 = vpop.f32.mrb[0].mxu0
        %v672 = vpop.f32.mrb[0].mxu0
        %v673 = vadd.f32 %v329, %v672
        %v674 = vpop.f32.mrb[0].mxu0
        %675 = vmatprep.mubr.bf16.mxu0 %v442
        %676 = vmatmul.mubr.bf16.gmra.mrb[0].mxu0 %v441
        %v677 = vpop.f32.mrb[0].mxu0
        %v678 = vadd.f32 %v329, %v677
        %v679 = vpop.f32.mrb[0].mxu0
        %v680 = vpop.f32.mrb[0].mxu0
        %v681 = vadd.f32 %v329, %v680
        %v682 = vpop.f32.mrb[0].mxu0
        %683 = vmatprep.mubr.bf16.mxu0 %v444
        %684 = vmatmul.mubr.bf16.gmra.mrb[0].mxu0 %v443
        %v685 = vpop.f32.mrb[0].mxu0
        %v686 = vadd.f32 %v329, %v685
        %v687 = vpop.f32.mrb[0].mxu0
        %v688 = vpop.f32.mrb[0].mxu0
        %v689 = vadd.f32 %v329, %v688
        %v690 = vpop.f32.mrb[0].mxu0
        %691 = vmatprep.mubr.bf16.mxu0 %v446
        %692 = vmatmul.mubr.bf16.gmra.mrb[0].mxu0 %v445
        %v693 = vpop.f32.mrb[0].mxu0
        %v694 = vadd.f32 %v329, %v693
        %v695 = vpop.f32.mrb[0].mxu0
        %v696 = vpop.f32.mrb[0].mxu0
        %v697 = vadd.f32 %v329, %v696
        %v698 = vpop.f32.mrb[0].mxu0
        %699 = vmatprep.mubr.bf16.mxu0 %v448
        %700 = vmatmul.mubr.bf16.gmra.mrb[0].mxu0 %v447
        %v701 = vpop.f32.mrb[0].mxu0
        %v702 = vadd.f32 %v329, %v701
        %v703 = vpop.f32.mrb[0].mxu0
        %v704 = vpop.f32.mrb[0].mxu0
        %v705 = vadd.f32 %v329, %v704
        %v706 = vpop.f32.mrb[0].mxu0
        %707 = vmatprep.mubr.bf16.mxu0 %v450
        %708 = vmatmul.mubr.bf16.gmra.mrb[0].mxu0 %v449
        %v709 = vpop.f32.mrb[0].mxu0
        %v710 = vadd.f32 %v329, %v709
        %v711 = vpop.f32.mrb[0].mxu0
        %v712 = vpop.f32.mrb[0].mxu0
        %v713 = vadd.f32 %v329, %v712
        %v714 = vpop.f32.mrb[0].mxu0
        %715 = vmatprep.mubr.bf16.mxu0 %v452
        %716 = vmatmul.mubr.bf16.gmra.mrb[0].mxu0 %v451
        %v717 = vpop.f32.mrb[0].mxu0
        %v718 = vadd.f32 %v329, %v717
        %v719 = vpop.f32.mrb[0].mxu0
        %v720 = vpop.f32.mrb[0].mxu0
        %v721 = vadd.f32 %v329, %v720
        %v722 = vpop.f32.mrb[0].mxu0
        %723 = vmatprep.mubr.bf16.mxu0 %v454
        %724 = vmatmul.mubr.bf16.gmra.mrb[0].mxu0 %v453
        %v725 = vpop.f32.mrb[0].mxu0
        %v726 = vadd.f32 %v329, %v725
        %v727 = vpop.f32.mrb[0].mxu0
        %v728 = vpop.f32.mrb[0].mxu0
        %v729 = vadd.f32 %v329, %v728
        %v730 = vpop.f32.mrb[0].mxu0
        %731 = vmatprep.mubr.bf16.mxu0 %v456
        %732 = vmatmul.mubr.bf16.gmra.mrb[0].mxu0 %v455
        %v733 = vpop.f32.mrb[0].mxu0
        %v734 = vadd.f32 %v329, %v733
        %v735 = vpop.f32.mrb[0].mxu0
        %v736 = vpop.f32.mrb[0].mxu0
        %v737 = vadd.f32 %v329, %v736
        %v738 = vpop.f32.mrb[0].mxu0
        %739 = vmatprep.mubr.bf16.mxu0 %v458
        %740 = vmatmul.mubr.bf16.gmra.mrb[0].mxu0 %v457
        %v741 = vpop.f32.mrb[0].mxu0
        %v742 = vadd.f32 %v329, %v741
        %v743 = vpop.f32.mrb[0].mxu0
        %v744 = vpop.f32.mrb[0].mxu0
        %v745 = vadd.f32 %v329, %v744
        %v746 = vpop.f32.mrb[0].mxu0
        %747 = vdwg.mxu0
        %v748 = vmax.f32 %v622, 0.0
        %v749 = vmax.f32 %v625, 0.0
        %v750 = vmax.f32 %v630, 0.0
        %v751 = vmax.f32 %v633, 0.0
        %v752 = vmax.f32 %v638, 0.0
        %v753 = vmax.f32 %v641, 0.0
        %v754 = vmax.f32 %v646, 0.0
        %v755 = vmax.f32 %v649, 0.0
        %v756 = vmax.f32 %v654, 0.0
        %v757 = vmax.f32 %v657, 0.0
        %v758 = vmax.f32 %v662, 0.0
        %v759 = vmax.f32 %v665, 0.0
        %v760 = vmax.f32 %v670, 0.0
        %v761 = vmax.f32 %v673, 0.0
        %v762 = vmax.f32 %v678, 0.0
        %v763 = vmax.f32 %v681, 0.0
        %v764 = vmax.f32 %v686, 0.0
        %v765 = vmax.f32 %v689, 0.0
        %v766 = vmax.f32 %v694, 0.0
        %v767 = vmax.f32 %v697, 0.0
        %v768 = vmax.f32 %v702, 0.0
        %v769 = vmax.f32 %v705, 0.0
        %v770 = vmax.f32 %v710, 0.0
        %v771 = vmax.f32 %v713, 0.0
        %v772 = vmax.f32 %v718, 0.0
        %v773 = vmax.f32 %v721, 0.0
        %v774 = vmax.f32 %v726, 0.0
        %v775 = vmax.f32 %v729, 0.0
        %v776 = vmax.f32 %v734, 0.0
        %v777 = vmax.f32 %v737, 0.0
        %v778 = vmax.f32 %v742, 0.0
        %v779 = vmax.f32 %v745, 0.0
        %v780 = vpack.c.bf16 %v749, %v748
        %v781 = vpack.c.bf16 %v751, %v750
        %v782 = vpack.c.bf16 %v753, %v752
        %v783 = vpack.c.bf16 %v755, %v754
        %v784 = vpack.c.bf16 %v757, %v756
        %v785 = vpack.c.bf16 %v759, %v758
        %v786 = vpack.c.bf16 %v761, %v760
        %v787 = vpack.c.bf16 %v763, %v762
        %v788 = vpack.c.bf16 %v765, %v764
        %v789 = vpack.c.bf16 %v767, %v766
        %v790 = vpack.c.bf16 %v769, %v768
        %v791 = vpack.c.bf16 %v771, %v770
        %v792 = vpack.c.bf16 %v773, %v772
        %v793 = vpack.c.bf16 %v775, %v774
        %v794 = vpack.c.bf16 %v777, %v776
        %v795 = vpack.c.bf16 %v779, %v778
        %v812 = vunpack.c.l.b16 %v780
        %v813 = vunpack.c.h.b16 %v780
        %v814 = vunpack.c.l.b16 %v781
        %v815 = vunpack.c.h.b16 %v781
        %v816 = vunpack.c.l.b16 %v782
        %v817 = vunpack.c.h.b16 %v782
        %v818 = vunpack.c.l.b16 %v783
        %v819 = vunpack.c.h.b16 %v783
        %v820 = vunpack.c.l.b16 %v784
        %v821 = vunpack.c.h.b16 %v784
        %v822 = vunpack.c.l.b16 %v785
        %v823 = vunpack.c.h.b16 %v785
        %v824 = vunpack.c.l.b16 %v786
        %v825 = vunpack.c.h.b16 %v786
        %v826 = vunpack.c.l.b16 %v787
        %v827 = vunpack.c.h.b16 %v787
        %v828 = vunpack.c.l.b16 %v788
        %v829 = vunpack.c.h.b16 %v788
        %v830 = vunpack.c.l.b16 %v789
        %v831 = vunpack.c.h.b16 %v789
        %v832 = vunpack.c.l.b16 %v790
        %v833 = vunpack.c.h.b16 %v790
        %v834 = vunpack.c.l.b16 %v791
        %v835 = vunpack.c.h.b16 %v791
        %v836 = vunpack.c.l.b16 %v792
        %v837 = vunpack.c.h.b16 %v792
        %v838 = vunpack.c.l.b16 %v793
        %v839 = vunpack.c.h.b16 %v793
        %v840 = vunpack.c.l.b16 %v794
        %v841 = vunpack.c.h.b16 %v794
        %v842 = vunpack.c.l.b16 %v795
        %v843 = vunpack.c.h.b16 %v795
        %v844 = vpack.c.b16 %v812, %v812
        %v845 = vpack.c.b16 %v813, %v813
        %v846 = vpack.c.b16 %v814, %v814
        %v847 = vpack.c.b16 %v815, %v815
        %v848 = vpack.c.b16 %v816, %v816
        %v849 = vpack.c.b16 %v817, %v817
        %v850 = vpack.c.b16 %v818, %v818
        %v851 = vpack.c.b16 %v819, %v819
        %v852 = vpack.c.b16 %v820, %v820
        %v853 = vpack.c.b16 %v821, %v821
        %v854 = vpack.c.b16 %v822, %v822
        %v855 = vpack.c.b16 %v823, %v823
        %v856 = vpack.c.b16 %v824, %v824
        %v857 = vpack.c.b16 %v825, %v825
        %v858 = vpack.c.b16 %v826, %v826
        %v859 = vpack.c.b16 %v827, %v827
        %v860 = vpack.c.b16 %v828, %v828
        %v861 = vpack.c.b16 %v829, %v829
        %v862 = vpack.c.b16 %v830, %v830
        %v863 = vpack.c.b16 %v831, %v831
        %v864 = vpack.c.b16 %v832, %v832
        %v865 = vpack.c.b16 %v833, %v833
        %v866 = vpack.c.b16 %v834, %v834
        %v867 = vpack.c.b16 %v835, %v835
        %v868 = vpack.c.b16 %v836, %v836
        %v869 = vpack.c.b16 %v837, %v837
        %v870 = vpack.c.b16 %v838, %v838
        %v871 = vpack.c.b16 %v839, %v839
        %v872 = vpack.c.b16 %v840, %v840
        %v873 = vpack.c.b16 %v841, %v841
        %v874 = vpack.c.b16 %v842, %v842
        %v875 = vpack.c.b16 %v843, %v843
        %908 = vst [vmem:[%s251] sm:$0xf] %v844
        %909 = vst [vmem:[%s251 + $0x4] sm:$0xf] %v845
        %910 = vst [vmem:[%s251 + $0x8] sm:$0xf] %v846
        %911 = vst [vmem:[%s251 + $0xc] sm:$0xf] %v847
        %912 = vst [vmem:[%s251 + $0x10] sm:$0xf] %v848
        %913 = vst [vmem:[%s251 + $0x14] sm:$0xf] %v849
        %914 = vst [vmem:[%s251 + $0x18] sm:$0xf] %v850
        %915 = vst [vmem:[%s251 + $0x1c] sm:$0xf] %v851
        %916 = vst [vmem:[%s251 + $0x20] sm:$0xf] %v852
        %917 = vst [vmem:[%s251 + $0x24] sm:$0xf] %v853
        %918 = vst [vmem:[%s251 + $0x28] sm:$0xf] %v854
        %919 = vst [vmem:[%s251 + $0x2c] sm:$0xf] %v855
        %920 = vst [vmem:[%s251 + $0x30] sm:$0xf] %v856
        %921 = vst [vmem:[%s251 + $0x34] sm:$0xf] %v857
        %922 = vst [vmem:[%s251 + $0x38] sm:$0xf] %v858
        %923 = vst [vmem:[%s251 + $0x3c] sm:$0xf] %v859
        %924 = vst [vmem:[%s251 + $0x40] sm:$0xf] %v860
        %925 = vst [vmem:[%s251 + $0x44] sm:$0xf] %v861
        %926 = vst [vmem:[%s251 + $0x48] sm:$0xf] %v862
        %927 = vst [vmem:[%s251 + $0x4c] sm:$0xf] %v863
        %928 = vst [vmem:[%s251 + $0x50] sm:$0xf] %v864
        %929 = vst [vmem:[%s251 + $0x54] sm:$0xf] %v865
        %930 = vst [vmem:[%s251 + $0x58] sm:$0xf] %v866
        %931 = vst [vmem:[%s251 + $0x5c] sm:$0xf] %v867
        %932 = vst [vmem:[%s251 + $0x60] sm:$0xf] %v868
        %933 = vst [vmem:[%s251 + $0x64] sm:$0xf] %v869
        %934 = vst [vmem:[%s251 + $0x68] sm:$0xf] %v870
        %935 = vst [vmem:[%s251 + $0x6c] sm:$0xf] %v871
        %936 = vst [vmem:[%s251 + $0x70] sm:$0xf] %v872
        %937 = vst [vmem:[%s251 + $0x74] sm:$0xf] %v873
        %938 = vst [vmem:[%s251 + $0x78] sm:$0xf] %v874
        %939 = vst [vmem:[%s251 + $0x7c] sm:$0xf] %v875
        %s940 = sand.u32 %s132, 1
        %s941 = scalar_lea.sflag [#allocation4], %s940
        %s942 = sand.u32 %s132, 1
        %s943 = smul.addr %s942, 128
        %s944 = scalar_lea.vmem [#allocation7], %s943
        // Predicated region
        $region41: #{tpu_custom_call.1} parent=31 // pred_check
          %p945 = pneg %p142
        $region42: #{tpu_custom_call.1} parent=31 // pred_check_branch
          %947 = sbr.rel (%p945) target = $region44
        $region43: #{tpu_custom_call.1} parent=31 // pred_region
          %s948 = smul.u32 32, %s26
          %s950 = ssub.s32 2048, 2048
          %951 = vsyncadd %s941, %s950
          %s952 = sadd.s32 %s27, %s948
          %s953 = smul.addr %s952, 64
          %s954 = scalar_lea.hbm %s3, %s953
          %s955 = sshll.u32 %s944, 4
          %s956 = int_to_ptr.vmem [resolvable:$true] %s955
          %961 = dma.vmem_to_hbm [thread:$0]  %s956, 2048, %s954, %s941, 64, 64, 4
        $region44: #{tpu_custom_call.1} parent=31 // pred_fallthru
          _
      $region32: #{tpu_custom_call.1} parent=5 // pred_fallthru
        _
      %p962 = scmp.le.s32.totalorder 2, %s16
      // Predicated region
      $region45: #{tpu_custom_call.1} parent=5 // pred_check
        %p963 = pneg %p962
      $region46: #{tpu_custom_call.1} parent=5 // pred_check_branch
        %965 = sbr.rel (%p963) target = $region48
      $region47: #{tpu_custom_call.1} parent=5 // pred_region
        %s966 = ssub.s32 %s16, 2
        // Predicated region
        $region49: #{tpu_custom_call.1} parent=47 // pred_check
          %p967 = pneg %p148
        $region50: #{tpu_custom_call.1} parent=47 // pred_check_branch
          %969 = sbr.rel (%p967) target = $region52
        $region51: #{tpu_custom_call.1} parent=47 // pred_region
          %s970 = sand.u32 %s133, 1
          %s971 = scalar_lea.sflag [#allocation4], %s970
          %s972 = sand.u32 %s133, 1
          %s973 = smul.addr %s972, 128
          %s974 = scalar_lea.vmem [#allocation7], %s973
          %975 = dma.done %s971, 2048
        $region52: #{tpu_custom_call.1} parent=47 // pred_fallthru
          _
      $region48: #{tpu_custom_call.1} parent=5 // pred_fallthru
        _
    $region6: #{tpu_custom_call.1} parent=1 // loop_footer
      %s20 = sadd.s32 1, %s16
    $region7: #{tpu_custom_call.1} parent=1 // loop_footer_branch
      %15 = sbr.rel target = $region3
    $region8: #{tpu_custom_call.1} parent=1 // loop_exit
      _
    %976 = vsyncpa [#allocation3], 1
    %s977 = scalar_lea.sflag [#allocation3], 1
    %978 = vsyncpa %s977, 1
    %979 = vsyncpa [#allocation6], 1
    %980 = vsyncpa [#allocation4], 1
    %s981 = scalar_lea.sflag [#allocation4], 1
    %982 = vsyncpa %s981, 1

</llo_original>
